<compile_context>
chip_gen: v6e
topology: v6e:2x2x1
jax: 0.10.0
libtpu: 0.0.40
codegen_flags: <defaults>
</compile_context>

<pallas_src>
import jax
import jax.numpy as jnp
from jax.experimental import pallas as pl
from jax.experimental.pallas import tpu as pltpu


def _round_up(x, m):
    return ((x + m - 1) // m) * m


def bpr_kernel(u_ref, i1_ref, i2_ref, o_ref):
    # HBM-bound (~0.25 flop/byte): f32 compute is free and matches the f32 /
    # PyTorch reference even for bf16 inputs.
    u = u_ref[...].astype(jnp.float32)
    diff = i1_ref[...].astype(jnp.float32) - i2_ref[...].astype(jnp.float32)
    sim = jnp.sum(u * diff, axis=-1)                  # (TB,) VPU mul + XLU lane reduce
    # -log(sigmoid(x)) == softplus(-x), numerically stable (EUP exp/log).
    loss = jnp.logaddexp(jnp.float32(0.0), -sim)      # (TB,)
    # Lane-dense store: (TB,) -> (1, TB) slab of the (1, B) output.
    o_ref[...] = loss.reshape(o_ref.shape).astype(o_ref.dtype)


def _choose_block_rows(B, D, itemsize):
    # ~4 MiB per input block => 3 inputs x 2 pipeline buffers ~= 24 MiB in VMEM.
    target_bytes = 4 * 1024 * 1024
    rows = (target_bytes // max(1, D * itemsize)) // 128 * 128
    rows = max(128, rows)
    # Keep at least 2 grid steps when B allows a lane-aligned split, so v7x's
    # second TensorCore gets work (harmless on single-TC v5e/v6e).
    rows = min(rows, _round_up(pl.cdiv(B, 2), 128))
    if rows >= B:
        return B            # single full-extent tile
    return rows


def bpr_loss(user_embs, item_embs_1, item_embs_2, *, block_rows=None):
    B, D = user_embs.shape
    assert item_embs_1.shape == (B, D) and item_embs_2.shape == (B, D)
    out_dtype = user_embs.dtype
    itemsize = jnp.dtype(user_embs.dtype).itemsize

    if block_rows is None:
        block_rows = _choose_block_rows(B, D, itemsize)
    # Sanitize: tiled blocks must be lane-aligned (block_rows is the output
    # block's last dim); a single tile may use the full extent directly.
    if block_rows >= B:
        block_rows = B
    elif block_rows % 128 != 0:
        block_rows = _round_up(block_rows, 128)
        if block_rows >= B:
            block_rows = B

    grid = pl.cdiv(B, block_rows)

    in_spec = pl.BlockSpec((block_rows, D), lambda i: (i, 0))
    cost = pl.CostEstimate(
        flops=3 * B * D,
        transcendentals=2 * B,
        bytes_accessed=3 * B * D * itemsize + B * jnp.dtype(out_dtype).itemsize,
    )

    out = pl.pallas_call(
        bpr_kernel,
        out_shape=jax.ShapeDtypeStruct((1, B), out_dtype),
        grid_spec=pltpu.PrefetchScalarGridSpec(
            num_scalar_prefetch=0,
            grid=(grid,),
            in_specs=[in_spec, in_spec, in_spec],
            out_specs=pl.BlockSpec((1, block_rows), lambda i: (0, i)),
        ),
        compiler_params=pltpu.CompilerParams(
            dimension_semantics=("parallel",),
            # Override v5e's 16 MiB default scoped-VMEM limit; well under v7x's
            # 64 MiB physical VMEM.
            vmem_limit_bytes=48 * 1024 * 1024,
        ),
        cost_estimate=cost,
    )(user_embs, item_embs_1, item_embs_2)

    # Back to the module's (B, 1) shape (free row-major reshape).
    return out.reshape(B, 1)


if __name__ == "__main__":
    key = jax.random.PRNGKey(0)
    k_u, k_i1, k_i2 = jax.random.split(key, 3)

    # Small single-tile case.
    B, D = 8, 32
    user_embs = jax.random.normal(k_u, (B, D), dtype=jnp.float32)
    item_embs_1 = jax.random.normal(k_i1, (B, D), dtype=jnp.float32)
    item_embs_2 = jax.random.normal(k_i2, (B, D), dtype=jnp.float32)

    out = bpr_loss(user_embs, item_embs_1, item_embs_2)
    jax.block_until_ready(out)

    sim_ref = jnp.sum(user_embs * (item_embs_1 - item_embs_2),
                      axis=-1, keepdims=True)
    ref = -jnp.log(jax.nn.sigmoid(sim_ref))
    assert out.shape == (B, 1)
    assert jnp.allclose(out, ref, atol=1e-5, rtol=1e-5)

    # Tiled, ragged multi-block path (B not a multiple of the tile) — no padding.
    B2, D2 = 300, 128
    ku2, k12, k22 = jax.random.split(jax.random.PRNGKey(1), 3)
    u2 = jax.random.normal(ku2, (B2, D2), dtype=jnp.float32)
    a2 = jax.random.normal(k12, (B2, D2), dtype=jnp.float32)
    b2 = jax.random.normal(k22, (B2, D2), dtype=jnp.float32)
    ref2 = -jnp.log(jax.nn.sigmoid(
        jnp.sum(u2 * (a2 - b2), axis=-1, keepdims=True)))

    out2 = bpr_loss(u2, a2, b2, block_rows=128)   # grid=3, last block 44 rows
    jax.block_until_ready(out2)
    assert out2.shape == (B2, 1)
    assert jnp.allclose(out2, ref2, atol=1e-4, rtol=1e-4)

    out3 = bpr_loss(u2, a2, b2)                   # auto heuristic: grid=2, ragged
    jax.block_until_ready(out3)
    assert out3.shape == (B2, 1)
    assert jnp.allclose(out3, ref2, atol=1e-4, rtol=1e-4)

    print("KERNEL_OK")
</pallas_src>

<mosaic_0001>
module attributes {stable_mosaic.version = 11 : i64} {
  func.func @bpr_kernel(%arg0: i32, %arg1: memref<8x32xf32, #tpu.memory_space<vmem>>, %arg2: memref<8x32xf32, #tpu.memory_space<vmem>>, %arg3: memref<8x32xf32, #tpu.memory_space<vmem>>, %arg4: memref<1x8xf32, #tpu.memory_space<vmem>>) attributes {dimension_semantics = [#tpu.dimension_semantics<parallel>], iteration_bounds = array<i64: 1>, scalar_prefetch = 0 : i64, scratch_operands = 0 : i64, tpu.core_type = #tpu.core_type<tc>, window_params = [{transform_indices = @transform_0, window_bounds = array<i64: 8, 32>}, {transform_indices = @transform_1, window_bounds = array<i64: 8, 32>}, {transform_indices = @transform_2, window_bounds = array<i64: 8, 32>}, {transform_indices = @transform_3, window_bounds = array<i64: 1, 8>}]} {
    %c0 = arith.constant 0 : index
    %c0_0 = arith.constant 0 : index
    %0 = vector.load %arg1[%c0, %c0_0] : memref<8x32xf32, #tpu.memory_space<vmem>>, vector<8x32xf32>
    %c0_1 = arith.constant 0 : index
    %c0_2 = arith.constant 0 : index
    %1 = vector.load %arg2[%c0_1, %c0_2] : memref<8x32xf32, #tpu.memory_space<vmem>>, vector<8x32xf32>
    %c0_3 = arith.constant 0 : index
    %c0_4 = arith.constant 0 : index
    %2 = vector.load %arg3[%c0_3, %c0_4] : memref<8x32xf32, #tpu.memory_space<vmem>>, vector<8x32xf32>
    %3 = arith.subf %1, %2 : vector<8x32xf32>
    %4 = arith.mulf %0, %3 : vector<8x32xf32>
    %cst = arith.constant dense<0.000000e+00> : vector<8xf32>
    %5 = vector.multi_reduction <add>, %4, %cst [1] : vector<8x32xf32> to vector<8xf32>
    %cst_5 = arith.constant 0.000000e+00 : f32
    %6 = vector.broadcast %cst_5 : f32 to vector<8xf32>
    %7 = arith.subf %6, %5 : vector<8xf32>
    %cst_6 = arith.constant 0.000000e+00 : f32
    %8 = vector.broadcast %cst_6 : f32 to vector<8xf32>
    %9 = arith.maximumf %8, %7 : vector<8xf32>
    %10 = vector.broadcast %cst_6 : f32 to vector<8xf32>
    %11 = arith.subf %10, %7 : vector<8xf32>
    %12 = arith.cmpf one, %11, %11 : vector<8xf32>
    %13 = vector.broadcast %cst_6 : f32 to vector<8xf32>
    %14 = arith.addf %13, %7 : vector<8xf32>
    %15 = math.absf %11 : vector<8xf32>
    %cst_7 = arith.constant 0.000000e+00 : f32
    %16 = vector.broadcast %cst_7 : f32 to vector<8xf32>
    %17 = arith.subf %16, %15 : vector<8xf32>
    %18 = math.exp %17 : vector<8xf32>
    %19 = math.log1p %18 : vector<8xf32>
    %20 = arith.addf %9, %19 : vector<8xf32>
    %21 = arith.select %12, %14, %20 : vector<8xi1>, vector<8xf32>
    %22 = vector.shape_cast %21 : vector<8xf32> to vector<1x8xf32>
    %c0_8 = arith.constant 0 : index
    %c0_9 = arith.constant 0 : index
    %23 = vector.load %arg4[%c0_8, %c0_9] : memref<1x8xf32, #tpu.memory_space<vmem>>, vector<1x8xf32>
    tpu.vector_store %arg4[%c0_8, %c0_9], %22 {strides = array<i32>} : memref<1x8xf32, #tpu.memory_space<vmem>>, vector<1x8xf32>,
    return
  }
  func.func @transform_0(%arg0: i32) -> (i32, i32) {
    %c0_i32 = arith.constant 0 : i32
    %c0_i32_0 = arith.constant 0 : i32
    return %arg0, %c0_i32 : i32, i32
  }
  func.func @transform_1(%arg0: i32) -> (i32, i32) {
    %c0_i32 = arith.constant 0 : i32
    %c0_i32_0 = arith.constant 0 : i32
    return %arg0, %c0_i32 : i32, i32
  }
  func.func @transform_2(%arg0: i32) -> (i32, i32) {
    %c0_i32 = arith.constant 0 : i32
    %c0_i32_0 = arith.constant 0 : i32
    return %arg0, %c0_i32 : i32, i32
  }
  func.func @transform_3(%arg0: i32) -> (i32, i32) {
    %c0_i32 = arith.constant 0 : i32
    %c0_i32_0 = arith.constant 0 : i32
    return %c0_i32, %arg0 : i32, i32
  }
}

</mosaic_0001>

<llo_original>
// kernel: tpu_custom_call.1
$region0: #{tpu_custom_call.1}
  #allocation0 [shape = 'u32[]', space=smem, size = 0x4, offset = 0x4, fixed_abs, tag = 'smem constant byte address 0x4 - core index']
  #allocation1 [shape = 'u32[144,128]{1,0:T(1,128)}', space=vmem, size = 0x12000, scoped, tag = 'internal scratch']
  %s0 = inlined_call_operand.hbm [shape: f32[8,32], index: 0, kind: input, shape index: {}]
  %s1 = inlined_call_operand.hbm [shape: f32[8,32], index: 1, kind: input, shape index: {}]
  %s2 = inlined_call_operand.hbm [shape: f32[8,32], index: 2, kind: input, shape index: {}]
  %s3 = inlined_call_operand.hbm [shape: f32[1,8], index: 3, kind: output, shape index: {}]
  %s4 = sld [smem:[#allocation0]]
  $region34: #{tpu_custom_call.1} parent=0
    _
  %s6 = ssub.s32 1, %s4
  %s7 = scalar_select 0, %s6, %s4
  $region1: #{tpu_custom_call.1} parent=0
    #allocation2 [shape = 'u8[4096]{0}', space=vmem, size = 0x1000, scoped, tag = 'input window, operand 0, single buffered']
    #allocation3 [shape = 's32[1]{0}', space=sflag, size = 0x4, scoped, tag = 'scoped memory for tpu_custom_call.1']
    #allocation4 [shape = 's32[1]{0}', space=sflag, size = 0x4, scoped, tag = 'scoped memory for tpu_custom_call.1']
    #allocation5 [shape = 'u8[4096]{0}', space=vmem, size = 0x1000, scoped, tag = 'input window, operand 1, single buffered']
    #allocation6 [shape = 's32[1]{0}', space=sflag, size = 0x4, scoped, tag = 'scoped memory for tpu_custom_call.1']
    #allocation7 [shape = 'u8[4096]{0}', space=vmem, size = 0x1000, scoped, tag = 'input window, operand 2, single buffered']
    #allocation8 [shape = 'u8[512]{0}', space=vmem, size = 0x400, scoped, tag = 'output window, operand 0, single buffered']
    %8 = vsyncpa [#allocation3], 0
    %9 = vsyncpa [#allocation6], 0
    %10 = vsyncpa [#allocation4], 0
    // Predicated region
    $region2: #{tpu_custom_call.1} parent=1 // pred_check
      _
    $region3: #{tpu_custom_call.1} parent=1 // pred_check_branch
      %12 = sbr.rel (0) target = $region5
    $region4: #{tpu_custom_call.1} parent=1 // pred_region
      %s14 = ssub.s32 128, 128
      %15 = vsyncadd [#allocation3], %s14
      %s17 = sshll.u32 [#allocation2], 4
      %s18 = int_to_ptr.vmem [resolvable:$true] %s17
      %20 = dma.hbm_to_vmem [thread:$0]  %s0, 128, %s18, [#allocation3]
    $region5: #{tpu_custom_call.1} parent=1 // pred_fallthru
      _
    // Predicated region
    $region6: #{tpu_custom_call.1} parent=1 // pred_check
      _
    $region7: #{tpu_custom_call.1} parent=1 // pred_check_branch
      %22 = sbr.rel (0) target = $region9
    $region8: #{tpu_custom_call.1} parent=1 // pred_region
      %s24 = ssub.s32 128, 128
      %25 = vsyncadd [#allocation6], %s24
      %s27 = sshll.u32 [#allocation5], 4
      %s28 = int_to_ptr.vmem [resolvable:$true] %s27
      %30 = dma.hbm_to_vmem [thread:$0]  %s1, 128, %s28, [#allocation6]
    $region9: #{tpu_custom_call.1} parent=1 // pred_fallthru
      _
    // Predicated region
    $region10: #{tpu_custom_call.1} parent=1 // pred_check
      _
    $region11: #{tpu_custom_call.1} parent=1 // pred_check_branch
      %32 = sbr.rel (0) target = $region13
    $region12: #{tpu_custom_call.1} parent=1 // pred_region
      %s34 = ssub.s32 128, 128
      %35 = vsyncadd [#allocation6], %s34
      %s37 = sshll.u32 [#allocation7], 4
      %s38 = int_to_ptr.vmem [resolvable:$true] %s37
      %40 = dma.hbm_to_vmem [thread:$0]  %s2, 128, %s38, [#allocation6]
    $region13: #{tpu_custom_call.1} parent=1 // pred_fallthru
      _
    // Predicated region
    $region14: #{tpu_custom_call.1} parent=1 // pred_check
      _
    $region15: #{tpu_custom_call.1} parent=1 // pred_check_branch
      %42 = sbr.rel (0) target = $region17
    $region16: #{tpu_custom_call.1} parent=1 // pred_region
      %43 = dma.done [#allocation3], 128
    $region17: #{tpu_custom_call.1} parent=1 // pred_fallthru
      _
    // Predicated region
    $region18: #{tpu_custom_call.1} parent=1 // pred_check
      _
    $region19: #{tpu_custom_call.1} parent=1 // pred_check_branch
      %45 = sbr.rel (0) target = $region21
    $region20: #{tpu_custom_call.1} parent=1 // pred_region
      %46 = dma.done [#allocation6], 128
    $region21: #{tpu_custom_call.1} parent=1 // pred_fallthru
      _
    // Predicated region
    $region22: #{tpu_custom_call.1} parent=1 // pred_check
      _
    $region23: #{tpu_custom_call.1} parent=1 // pred_check_branch
      %48 = sbr.rel (0) target = $region25
    $region24: #{tpu_custom_call.1} parent=1 // pred_region
      %49 = dma.done [#allocation6], 128
    $region25: #{tpu_custom_call.1} parent=1 // pred_fallthru
      _
    %v50 = vld [vmem:[#allocation2] sm:$0xff]
    %v51 = vld [vmem:[#allocation5] sm:$0xff]
    %v52 = vld [vmem:[#allocation7] sm:$0xff]
    %v53 = vsub.f32 %v51, %v52
    %v54 = vmul.f32 %v50, %v53
    %vm55 = vcmask 261120
    %v56 = vsel %vm55, %v54, 0.0
    %57 = vadd.xlane.f32.xlu0 %v56
    %v58 = vpop.xlane.xlu0 %57
    %v59 = vsub.f32 0.0, %v58
    %v60 = vmax.f32 %v59, 0.0
    %v61 = vsub.f32 0.0, %v59
    %vm62 = vcmp.ne.f32.partialorder %v61, %v61
    %v63 = vadd.f32 %v59, 0.0
    %v64 = vand.u32 2147483647, %v61
    %v65 = vsub.f32 0.0, %v64
    %v66 = vmul.f32 %v65, 1.442695
    %v67 = vpow.pop %v66
    %v68 = vadd.f32 %v67, 1.0
    %v69 = vlog2.pop %v68
    %v70 = vmul.f32 %v69, 0.6931472
    %v71 = vmul.f32 -0.5, %v67
    %v72 = vadd.f32 %v71, 1.0
    %v73 = vmul.f32 %v72, %v67
    %v74 = vand.u32 2147483647, %v67
    %vm75 = vcmp.lt.f32.partialorder %v74, 0.0004427343
    %v76 = vsel %vm75, %v73, %v70
    %v77 = vadd.f32 %v60, %v76
    %v78 = vsel %vm62, %v63, %v77
    %v80 = vlaneseq
    %v81 = vand.u32 %v80, 127
    %v82 = vlaneseq
    %v83 = vshrl.u32 %v82, 7
    %v84 = vsub.s32 %v81, %v83
    %v85 = vrot.slane %v78, %v84
    %vm87 = vcmask 57344
    %88 = vst.msk [vmem:[#allocation8] sm:$0x1] %vm87, %v85
    // Predicated region
    $region26: #{tpu_custom_call.1} parent=1 // pred_check
      _
    $region27: #{tpu_custom_call.1} parent=1 // pred_check_branch
      %90 = sbr.rel (0) target = $region29
    $region28: #{tpu_custom_call.1} parent=1 // pred_region
      %s92 = ssub.s32 16, 16
      %93 = vsyncadd [#allocation4], %s92
      %s95 = sshll.u32 [#allocation8], 4
      %s96 = int_to_ptr.vmem [resolvable:$true] %s95
      %98 = dma.vmem_to_hbm [thread:$0]  %s96, 16, %s3, [#allocation4]
    $region29: #{tpu_custom_call.1} parent=1 // pred_fallthru
      _
    // Predicated region
    $region30: #{tpu_custom_call.1} parent=1 // pred_check
      _
    $region31: #{tpu_custom_call.1} parent=1 // pred_check_branch
      %100 = sbr.rel (0) target = $region33
    $region32: #{tpu_custom_call.1} parent=1 // pred_region
      %101 = dma.done [#allocation4], 16
    $region33: #{tpu_custom_call.1} parent=1 // pred_fallthru
      _
    %102 = vsyncpa [#allocation3], 1
    %103 = vsyncpa [#allocation6], 1
    %104 = vsyncpa [#allocation4], 1

</llo_original>
